<compile_context>
chip_gen: v6e
topology: v6e:2x2x1
jax: 0.10.0
libtpu: 0.0.40
codegen_flags: <defaults>
</compile_context>

<pallas_src>
import jax
import jax.numpy as jnp
from jax import lax
from jax.experimental import pallas as pl
from jax.experimental.pallas import tpu as pltpu


def _make_mlp_kernel(H, h_chunk):
    n_chunks = -(-H // h_chunk)  # static; wrapper guarantees H % h_chunk == 0 when > 1

    def kernel(x_ref, w1_ref, b1_ref, w2_ref, b2_ref, o_ref):
        x = x_ref[...]                                      # (TB, D) f32
        tb = x.shape[0]

        def chunk(lo, size):
            w1_c = w1_ref[pl.ds(lo, size), :]               # (size, D) native Linear layout
            b1_c = b1_ref[:, pl.ds(lo, size)]               # (1, size)
            w2_c = w2_ref[:, pl.ds(lo, size)]               # (1, size)
            # Hidden layer on the MXU, contracting dim 1 of both (== x @ W1^T).
            h = lax.dot_general(x, w1_c, (((1,), (1,)), ((), ())),
                                preferred_element_type=jnp.float32)   # (TB, size)
            h = jnp.tanh(h + b1_c)                          # EUP tanh (free slot)
            # Output layer (N=1) as a second MXU dot_general with W2 as LHS so
            # the result is already a lane-dense (1, TB) row.
            return lax.dot_general(w2_c, h, (((1,), (1,)), ((), ())),
                                   preferred_element_type=jnp.float32)  # (1, TB)

        if n_chunks == 1:
            row = chunk(0, H)
        else:
            def body(c, acc):
                lo = pl.multiple_of(c * h_chunk, h_chunk)
                return acc + chunk(lo, h_chunk)
            row = lax.fori_loop(0, n_chunks, body, jnp.zeros((1, tb), jnp.float32))

        o_ref[...] = (row + b2_ref[0, 0]).astype(o_ref.dtype)

    return kernel


def _round_up(x, m):
    return -(-x // m) * m


def _vmem_capacity_bytes():
    try:
        return int(pltpu.get_tpu_info().vmem_capacity_bytes)
    except Exception:
        return 64 << 20       # conservative fallback (smallest physical VMEM: v7x)


def _pick_h_chunk(H):
    if H <= 512:
        return H
    for c in (512, 256, 128):
        if H % c == 0:
            return c
    return H                  # odd H: keep a single pass


def _choose_tile_rows(B, D, H, h_chunk, vmem_budget, max_tile_rows=1024):
    """Batch-tile rows from a VMEM budget; lane-dense out block needs TB % 128 == 0
    whenever TB < B."""
    per_row = (2 * D + min(H, h_chunk) + 2) * 4      # x (2 bufs) + hidden staging + out (2 bufs)
    resident = (H * D + 2 * H) * 4                   # W1 + b1 + W2 (single-buffered)
    rows = max((vmem_budget - resident) // per_row, 128)
    tb = min(rows, max_tile_rows)
    if B <= tb and B < 256:
        return B                                     # tiny batch: one full tile
    # Multi-tile path: split >= 2 ways so a v7x megacore can shard the
    # "parallel" batch axis across both TensorCores.
    tb = min(tb, _round_up(-(-B // 2), 128))
    return max((tb // 128) * 128, 128)


def nn_forward(x, w1, b1, w2, b2, *, max_tile_rows=1024):
    """Forward pass of NN: tanh(x @ W1^T + b1) @ W2^T + b2.

    x : [B, D] float32
    w1: [H, D] (native PyTorch Linear layout),  b1: [H]
    w2: [1, H] (native PyTorch Linear layout),  b2: [1]
    """
    B, D = x.shape
    H = w1.shape[0]

    b1_2d = b1.reshape(1, H)      # lane-dense bias row
    b2_2d = b2.reshape(1, 1)      # scalar -> SMEM

    h_chunk = _pick_h_chunk(H)
    capacity = _vmem_capacity_bytes()
    TB = _choose_tile_rows(B, D, H, h_chunk, capacity // 2, max_tile_rows)
    grid = (pl.cdiv(B, TB),)

    # Estimated VMEM footprint of this tiling (headroom for compiler scratch).
    est = (2 * TB * D + H * D + 2 * H + TB * min(H, h_chunk) + 2 * TB) * 4
    vmem_limit = int(min(max(4 * est, 32 << 20), int(capacity * 0.9)))

    out_row = pl.pallas_call(
        _make_mlp_kernel(H, h_chunk),
        out_shape=jax.ShapeDtypeStruct((1, B), x.dtype),
        grid_spec=pltpu.PrefetchScalarGridSpec(
            num_scalar_prefetch=0,
            grid=grid,
            in_specs=[
                pl.BlockSpec((TB, D), lambda i: (i, 0)),             # x tile (pipelined)
                pl.BlockSpec((H, D), lambda i: (0, 0),
                             pipeline_mode=pl.Buffered(1)),          # W1 resident, native layout
                pl.BlockSpec((1, H), lambda i: (0, 0),
                             pipeline_mode=pl.Buffered(1)),          # b1 resident
                pl.BlockSpec((1, H), lambda i: (0, 0),
                             pipeline_mode=pl.Buffered(1)),          # W2 resident, native layout
                pl.BlockSpec(memory_space=pltpu.MemorySpace.SMEM),   # b2 scalar in SMEM
            ],
            out_specs=pl.BlockSpec((1, TB), lambda i: (0, i)),       # lane-dense output row
        ),
        compiler_params=pltpu.CompilerParams(
            dimension_semantics=("parallel",),      # batch axis -> megacore shard on v7x
            vmem_limit_bytes=vmem_limit),
    )(x, w1, b1_2d, w2, b2_2d)

    return out_row.reshape(B, 1)


if __name__ == "__main__":
    key = jax.random.PRNGKey(0)
    kx, kw1, kb1, kw2, kb2 = jax.random.split(key, 5)

    batch, input_size, hidden_size = 8, 16, 32

    # torch.nn.Linear default init: U(-1/sqrt(in_features), 1/sqrt(in_features))
    bound1 = 1.0 / (input_size ** 0.5)
    w1 = jax.random.uniform(kw1, (hidden_size, input_size), jnp.float32, -bound1, bound1)
    b1 = jax.random.uniform(kb1, (hidden_size,), jnp.float32, -bound1, bound1)

    bound2 = 1.0 / (hidden_size ** 0.5)
    w2 = jax.random.uniform(kw2, (1, hidden_size), jnp.float32, -bound2, bound2)
    b2 = jax.random.uniform(kb2, (1,), jnp.float32, -bound2, bound2)

    x = jax.random.normal(kx, (batch, input_size), jnp.float32)

    y = nn_forward(x, w1, b1, w2, b2)
    y = jax.block_until_ready(y)

    # Pure-JAX reference with the same semantics as the PyTorch forward.
    h_ref = jnp.tanh(x @ w1.T + b1)
    y_ref = h_ref @ w2.T + b2

    assert y.shape == (batch, 1)
    assert jnp.allclose(y, y_ref, atol=1e-4, rtol=1e-5), "mismatch vs reference"

    print("KERNEL_OK")
</pallas_src>

<mosaic_0001>
module attributes {stable_mosaic.version = 11 : i64} {
  func.func @kernel(%arg0: i32, %arg1: memref<8x16xf32, #tpu.memory_space<vmem>>, %arg2: memref<32x16xf32, #tpu.memory_space<vmem>>, %arg3: memref<1x32xf32, #tpu.memory_space<vmem>>, %arg4: memref<1x32xf32, #tpu.memory_space<vmem>>, %arg5: memref<1x1xf32, #tpu.memory_space<smem>>, %arg6: memref<1x8xf32, #tpu.memory_space<vmem>>) attributes {dimension_semantics = [#tpu.dimension_semantics<parallel>], iteration_bounds = array<i64: 1>, scalar_prefetch = 0 : i64, scratch_operands = 0 : i64, tpu.core_type = #tpu.core_type<tc>, window_params = [{transform_indices = @transform_0, window_bounds = array<i64: 8, 16>}, {pipeline_mode = #tpu.pipeline_mode<synchronous>, transform_indices = @transform_1, window_bounds = array<i64: 32, 16>}, {pipeline_mode = #tpu.pipeline_mode<synchronous>, transform_indices = @transform_2, window_bounds = array<i64: 1, 32>}, {pipeline_mode = #tpu.pipeline_mode<synchronous>, transform_indices = @transform_3, window_bounds = array<i64: 1, 32>}, {transform_indices = @transform_4, window_bounds = array<i64: 1, 1>}, {transform_indices = @transform_5, window_bounds = array<i64: 1, 8>}]} {
    %c0 = arith.constant 0 : index
    %c0_0 = arith.constant 0 : index
    %0 = vector.load %arg1[%c0, %c0_0] : memref<8x16xf32, #tpu.memory_space<vmem>>, vector<8x16xf32>
    %c0_1 = arith.constant 0 : index
    %c0_2 = arith.constant 0 : index
    %1 = vector.load %arg2[%c0_1, %c0_2] : memref<32x16xf32, #tpu.memory_space<vmem>>, vector<32x16xf32>
    %c0_3 = arith.constant 0 : index
    %c0_4 = arith.constant 0 : index
    %2 = vector.load %arg3[%c0_3, %c0_4] : memref<1x32xf32, #tpu.memory_space<vmem>>, vector<1x32xf32>
    %c0_5 = arith.constant 0 : index
    %c0_6 = arith.constant 0 : index
    %3 = vector.load %arg4[%c0_5, %c0_6] : memref<1x32xf32, #tpu.memory_space<vmem>>, vector<1x32xf32>
    %cst = arith.constant dense<0.000000e+00> : vector<8x32xf32>
    %4 = tpu.matmul %0, %1, %cst {dimension_numbers = #tpu.dot_dimension_numbers<[1], [1], [0], [0], [0, 0, 1, 0], [], []>} : vector<8x16xf32>, vector<32x16xf32>, vector<8x32xf32> -> vector<8x32xf32>
    %5 = vector.broadcast %2 : vector<1x32xf32> to vector<8x32xf32>
    %6 = arith.addf %4, %5 : vector<8x32xf32>
    %7 = math.tanh %6 : vector<8x32xf32>
    %cst_7 = arith.constant dense<0.000000e+00> : vector<1x8xf32>
    %8 = tpu.matmul %3, %7, %cst_7 {dimension_numbers = #tpu.dot_dimension_numbers<[1], [1], [0], [0], [0, 0, 1, 0], [], []>} : vector<1x32xf32>, vector<8x32xf32>, vector<1x8xf32> -> vector<1x8xf32>
    %c0_8 = arith.constant 0 : index
    %c0_9 = arith.constant 0 : index
    %9 = memref.load %arg5[%c0_8, %c0_9] : memref<1x1xf32, #tpu.memory_space<smem>>
    %10 = vector.broadcast %9 : f32 to vector<1x8xf32>
    %11 = arith.addf %8, %10 : vector<1x8xf32>
    %c0_10 = arith.constant 0 : index
    %c0_11 = arith.constant 0 : index
    %12 = vector.load %arg6[%c0_10, %c0_11] : memref<1x8xf32, #tpu.memory_space<vmem>>, vector<1x8xf32>
    tpu.vector_store %arg6[%c0_10, %c0_11], %11 {strides = array<i32>} : memref<1x8xf32, #tpu.memory_space<vmem>>, vector<1x8xf32>,
    return
  }
  func.func @transform_0(%arg0: i32) -> (i32, i32) {
    %c0_i32 = arith.constant 0 : i32
    %c0_i32_0 = arith.constant 0 : i32
    return %arg0, %c0_i32 : i32, i32
  }
  func.func @transform_1(%arg0: i32) -> (i32, i32) {
    %c0_i32 = arith.constant 0 : i32
    %c0_i32_0 = arith.constant 0 : i32
    %c0_i32_1 = arith.constant 0 : i32
    return %c0_i32, %c0_i32_0 : i32, i32
  }
  func.func @transform_2(%arg0: i32) -> (i32, i32) {
    %c0_i32 = arith.constant 0 : i32
    %c0_i32_0 = arith.constant 0 : i32
    %c0_i32_1 = arith.constant 0 : i32
    return %c0_i32, %c0_i32_0 : i32, i32
  }
  func.func @transform_3(%arg0: i32) -> (i32, i32) {
    %c0_i32 = arith.constant 0 : i32
    %c0_i32_0 = arith.constant 0 : i32
    %c0_i32_1 = arith.constant 0 : i32
    return %c0_i32, %c0_i32_0 : i32, i32
  }
  func.func @transform_4(%arg0: i32) -> (i32, i32) {
    %c0_i32 = arith.constant 0 : i32
    %c0_i32_0 = arith.constant 0 : i32
    %c0_i32_1 = arith.constant 0 : i32
    return %c0_i32, %c0_i32_0 : i32, i32
  }
  func.func @transform_5(%arg0: i32) -> (i32, i32) {
    %c0_i32 = arith.constant 0 : i32
    %c0_i32_0 = arith.constant 0 : i32
    return %c0_i32, %arg0 : i32, i32
  }
}

</mosaic_0001>

<llo_original>
// kernel: tpu_custom_call.1
$region0: #{tpu_custom_call.1}
  #allocation0 [shape = 'u32[]', space=smem, size = 0x4, offset = 0x4, fixed_abs, tag = 'smem constant byte address 0x4 - core index']
  #allocation1 [shape = 'u32[144,128]{1,0:T(1,128)}', space=vmem, size = 0x12000, scoped, tag = 'internal scratch']
  #allocation2 [shape = 'f32[1,1]{1,0:T(1,128)S(6)}', space=smem, size = 0x200, scoped, tag = 'scoped memory for tpu_custom_call.1']
  %s0 = inlined_call_operand.vmem [shape: f32[8,16], index: 0, kind: input, shape index: {}]
  %s1 = inlined_call_operand.vmem [shape: f32[32,16], index: 1, kind: input, shape index: {}]
  %s2 = inlined_call_operand.vmem [shape: f32[1,32], index: 2, kind: input, shape index: {}]
  %s3 = inlined_call_operand.vmem [shape: f32[1,32], index: 3, kind: input, shape index: {}]
  %s4 = inlined_call_operand.<no memory space> [shape: f32[1,1], index: 4, kind: input, shape index: {}]
  %s5 = inlined_call_operand.hbm [shape: f32[1,8], index: 5, kind: output, shape index: {}]
  %s6 = sld [smem:[#allocation0]]
  $region30: #{tpu_custom_call.1} parent=0
    _
  %s8 = ssub.s32 1, %s6
  %s9 = scalar_select 0, %s8, %s6
  %10 = sst [smem:[#allocation2]] %s4
  $region1: #{tpu_custom_call.1} parent=0
    #allocation3 [shape = 'u8[512]{0}', space=vmem, size = 0x400, scoped, tag = 'output window, operand 0, single buffered']
    #allocation4 [shape = 's32[1]{0}', space=sflag, size = 0x4, scoped, tag = 'scoped memory for tpu_custom_call.1']
    %11 = vsyncpa [#allocation4], 0
    // Predicated region
    $region2: #{tpu_custom_call.1} parent=1 // pred_check
      _
    $region3: #{tpu_custom_call.1} parent=1 // pred_check_branch
      %13 = sbr.rel (0) target = $region5
    $region4: #{tpu_custom_call.1} parent=1 // pred_region
      _
    $region5: #{tpu_custom_call.1} parent=1 // pred_fallthru
      _
    // Predicated region
    $region6: #{tpu_custom_call.1} parent=1 // pred_check
      _
    $region7: #{tpu_custom_call.1} parent=1 // pred_check_branch
      %15 = sbr.rel (0) target = $region9
    $region8: #{tpu_custom_call.1} parent=1 // pred_region
      _
    $region9: #{tpu_custom_call.1} parent=1 // pred_fallthru
      _
    // Predicated region
    $region10: #{tpu_custom_call.1} parent=1 // pred_check
      _
    $region11: #{tpu_custom_call.1} parent=1 // pred_check_branch
      %17 = sbr.rel (0) target = $region13
    $region12: #{tpu_custom_call.1} parent=1 // pred_region
      _
    $region13: #{tpu_custom_call.1} parent=1 // pred_fallthru
      _
    // Predicated region
    $region14: #{tpu_custom_call.1} parent=1 // pred_check
      _
    $region15: #{tpu_custom_call.1} parent=1 // pred_check_branch
      %19 = sbr.rel (0) target = $region17
    $region16: #{tpu_custom_call.1} parent=1 // pred_region
      _
    $region17: #{tpu_custom_call.1} parent=1 // pred_fallthru
      _
    // Predicated region
    $region18: #{tpu_custom_call.1} parent=1 // pred_check
      _
    $region19: #{tpu_custom_call.1} parent=1 // pred_check_branch
      %21 = sbr.rel (0) target = $region21
    $region20: #{tpu_custom_call.1} parent=1 // pred_region
      _
    $region21: #{tpu_custom_call.1} parent=1 // pred_fallthru
      _
    %v22 = vld [vmem:[%s0] sm:$0xff]
    %v23 = vld [vmem:[%s1] sm:$0xff]
    %v24 = vld [vmem:[%s1 + $0x8] sm:$0xff]
    %v25 = vld [vmem:[%s1 + $0x10] sm:$0xff]
    %v26 = vld [vmem:[%s1 + $0x18] sm:$0xff]
    %v27 = vld [vmem:[%s2] sm:$0x1]
    %v28 = vld [vmem:[%s3] sm:$0x1]
    %v30 = vlaneseq
    %v31 = vshrl.u32 %v30, 7
    %v32 = vsub.s32 0, %v31
    %v33 = vrot.slane %v27, %v32
    %vm35 = vcmask 130048
    %v37 = vsel %vm35, %v22, 0
    %v40 = vsel %vm35, %v23, 0
    %v43 = vsel %vm35, %v24, 0
    %v46 = vsel %vm35, %v25, 0
    %v49 = vsel %vm35, %v26, 0
    %51 = vmatprep.subr.mxu0 0.0
    %52 = vmatpush1.xpose.msra.mxu0 0.0
    %53 = vmatprep.subr.mxu0 0.0
    %54 = vmatpush1.xpose.msra.mxu0 0.0
    %55 = vmatprep.subr.mxu0 0.0
    %56 = vmatpush1.xpose.msra.mxu0 0.0
    %57 = vmatprep.subr.mxu0 0.0
    %58 = vmatpush1.xpose.msra.mxu0 0.0
    %59 = vmatprep.subr.mxu0 0.0
    %60 = vmatpush1.xpose.msra.mxu0 0.0
    %61 = vmatprep.subr.mxu0 0.0
    %62 = vmatpush1.xpose.msra.mxu0 0.0
    %63 = vmatprep.subr.mxu0 0.0
    %64 = vmatpush1.xpose.msra.mxu0 0.0
    %65 = vmatprep.subr.mxu0 0.0
    %66 = vmatpush1.xpose.msra.mxu0 0.0
    %67 = vmatprep.subr.mxu0 0.0
    %68 = vmatpush1.xpose.msra.mxu0 0.0
    %69 = vmatprep.subr.mxu0 0.0
    %70 = vmatpush1.xpose.msra.mxu0 0.0
    %71 = vmatprep.subr.mxu0 0.0
    %72 = vmatpush1.xpose.msra.mxu0 0.0
    %73 = vmatprep.subr.mxu0 0.0
    %74 = vmatpush1.xpose.msra.mxu0 0.0
    %75 = vmatprep.subr.mxu0 0.0
    %76 = vmatpush1.xpose.msra.mxu0 %v49
    %77 = vmatprep.subr.mxu0 0.0
    %78 = vmatpush1.xpose.msra.mxu0 %v46
    %79 = vmatprep.subr.mxu0 0.0
    %80 = vmatpush1.xpose.msra.mxu0 %v43
    %81 = vmatprep.subr.mxu0 0.0
    %82 = vmatpush1.xpose.msra.mxu0 %v40
    %83 = vmatprep.subr.mxu0 0.0
    %84 = vmatpush2.xpose.msra.mxu0 0.0
    %85 = vmatprep.subr.mxu0 0.0
    %86 = vmatpush2.xpose.msra.mxu0 0.0
    %87 = vmatprep.subr.mxu0 0.0
    %88 = vmatpush2.xpose.msra.mxu0 0.0
    %89 = vmatprep.subr.mxu0 0.0
    %90 = vmatpush2.xpose.msra.mxu0 0.0
    %91 = vmatprep.subr.mxu0 0.0
    %92 = vmatpush2.xpose.msra.mxu0 0.0
    %93 = vmatprep.subr.mxu0 0.0
    %94 = vmatpush2.xpose.msra.mxu0 0.0
    %95 = vmatprep.subr.mxu0 0.0
    %96 = vmatpush2.xpose.msra.mxu0 0.0
    %97 = vmatprep.subr.mxu0 0.0
    %98 = vmatpush2.xpose.msra.mxu0 0.0
    %99 = vmatprep.subr.mxu0 0.0
    %100 = vmatpush2.xpose.msra.mxu0 0.0
    %101 = vmatprep.subr.mxu0 0.0
    %102 = vmatpush2.xpose.msra.mxu0 0.0
    %103 = vmatprep.subr.mxu0 0.0
    %104 = vmatpush2.xpose.msra.mxu0 0.0
    %105 = vmatprep.subr.mxu0 0.0
    %106 = vmatpush2.xpose.msra.mxu0 0.0
    %107 = vmatprep.subr.mxu0 0.0
    %108 = vmatpush2.xpose.msra.mxu0 0.0
    %109 = vmatprep.subr.mxu0 0.0
    %110 = vmatpush2.xpose.msra.mxu0 0.0
    %111 = vmatprep.subr.mxu0 0.0
    %112 = vmatpush2.xpose.msra.mxu0 0.0
    %113 = vmatprep.subr.mxu0 0.0
    %114 = vmatpush2.xpose.msra.mxu0 0.0
    %115 = vmatprep.mubr.f32.mxu0 0.0
    %116 = vmatmul.mubr.f32.gmra.mxu0 %v37
    %v117 = vpop.f32.mrf.mxu0
    %v118 = vadd.f32 %v33, %v117
    %v119 = vpop.f32.mrf.mxu0
    %120 = vdwg.mxu0
    %v121 = vtanh.pop %v118
    %s122 = sld [smem:[#allocation2]]
    %v123 = vstv %s122
    %vm124 = vcmask 261120
    %v126 = vsel %vm124, %v28, 0
    %v129 = vsel %vm124, %v121, 0
    %131 = vmatprep.subr.mxu0 0.0
    %132 = vmatpush1.xpose.msra.mxu0 0.0
    %133 = vmatprep.subr.mxu0 0.0
    %134 = vmatpush1.xpose.msra.mxu0 0.0
    %135 = vmatprep.subr.mxu0 0.0
    %136 = vmatpush1.xpose.msra.mxu0 0.0
    %137 = vmatprep.subr.mxu0 0.0
    %138 = vmatpush1.xpose.msra.mxu0 0.0
    %139 = vmatprep.subr.mxu0 0.0
    %140 = vmatpush1.xpose.msra.mxu0 0.0
    %141 = vmatprep.subr.mxu0 0.0
    %142 = vmatpush1.xpose.msra.mxu0 0.0
    %143 = vmatprep.subr.mxu0 0.0
    %144 = vmatpush1.xpose.msra.mxu0 0.0
    %145 = vmatprep.subr.mxu0 0.0
    %146 = vmatpush1.xpose.msra.mxu0 0.0
    %147 = vmatprep.subr.mxu0 0.0
    %148 = vmatpush1.xpose.msra.mxu0 0.0
    %149 = vmatprep.subr.mxu0 0.0
    %150 = vmatpush1.xpose.msra.mxu0 0.0
    %151 = vmatprep.subr.mxu0 0.0
    %152 = vmatpush1.xpose.msra.mxu0 0.0
    %153 = vmatprep.subr.mxu0 0.0
    %154 = vmatpush1.xpose.msra.mxu0 0.0
    %155 = vmatprep.subr.mxu0 0.0
    %156 = vmatpush1.xpose.msra.mxu0 0.0
    %157 = vmatprep.subr.mxu0 0.0
    %158 = vmatpush1.xpose.msra.mxu0 0.0
    %159 = vmatprep.subr.mxu0 0.0
    %160 = vmatpush1.xpose.msra.mxu0 0.0
    %161 = vmatprep.subr.mxu0 0.0
    %162 = vmatpush1.xpose.msra.mxu0 %v129
    %163 = vmatprep.subr.mxu0 0.0
    %164 = vmatpush2.xpose.msra.mxu0 0.0
    %165 = vmatprep.subr.mxu0 0.0
    %166 = vmatpush2.xpose.msra.mxu0 0.0
    %167 = vmatprep.subr.mxu0 0.0
    %168 = vmatpush2.xpose.msra.mxu0 0.0
    %169 = vmatprep.subr.mxu0 0.0
    %170 = vmatpush2.xpose.msra.mxu0 0.0
    %171 = vmatprep.subr.mxu0 0.0
    %172 = vmatpush2.xpose.msra.mxu0 0.0
    %173 = vmatprep.subr.mxu0 0.0
    %174 = vmatpush2.xpose.msra.mxu0 0.0
    %175 = vmatprep.subr.mxu0 0.0
    %176 = vmatpush2.xpose.msra.mxu0 0.0
    %177 = vmatprep.subr.mxu0 0.0
    %178 = vmatpush2.xpose.msra.mxu0 0.0
    %179 = vmatprep.subr.mxu0 0.0
    %180 = vmatpush2.xpose.msra.mxu0 0.0
    %181 = vmatprep.subr.mxu0 0.0
    %182 = vmatpush2.xpose.msra.mxu0 0.0
    %183 = vmatprep.subr.mxu0 0.0
    %184 = vmatpush2.xpose.msra.mxu0 0.0
    %185 = vmatprep.subr.mxu0 0.0
    %186 = vmatpush2.xpose.msra.mxu0 0.0
    %187 = vmatprep.subr.mxu0 0.0
    %188 = vmatpush2.xpose.msra.mxu0 0.0
    %189 = vmatprep.subr.mxu0 0.0
    %190 = vmatpush2.xpose.msra.mxu0 0.0
    %191 = vmatprep.subr.mxu0 0.0
    %192 = vmatpush2.xpose.msra.mxu0 0.0
    %193 = vmatprep.subr.mxu0 0.0
    %194 = vmatpush2.xpose.msra.mxu0 0.0
    %195 = vmatprep.mubr.f32.mxu0 0.0
    %196 = vmatmul.mubr.f32.gmra.mxu0 %v126
    %v197 = vpop.f32.mrf.mxu0
    %v198 = vadd.f32 %v123, %v197
    %v199 = vpop.f32.mrf.mxu0
    %200 = vdwg.mxu0
    %vm201 = vcmask 57344
    %202 = vst.msk [vmem:[#allocation3] sm:$0x1] %vm201, %v198
    // Predicated region
    $region22: #{tpu_custom_call.1} parent=1 // pred_check
      _
    $region23: #{tpu_custom_call.1} parent=1 // pred_check_branch
      %204 = sbr.rel (0) target = $region25
    $region24: #{tpu_custom_call.1} parent=1 // pred_region
      %s206 = ssub.s32 16, 16
      %207 = vsyncadd [#allocation4], %s206
      %s209 = sshll.u32 [#allocation3], 4
      %s210 = int_to_ptr.vmem [resolvable:$true] %s209
      %212 = dma.vmem_to_hbm [thread:$0]  %s210, 16, %s5, [#allocation4]
    $region25: #{tpu_custom_call.1} parent=1 // pred_fallthru
      _
    // Predicated region
    $region26: #{tpu_custom_call.1} parent=1 // pred_check
      _
    $region27: #{tpu_custom_call.1} parent=1 // pred_check_branch
      %214 = sbr.rel (0) target = $region29
    $region28: #{tpu_custom_call.1} parent=1 // pred_region
      %215 = dma.done [#allocation4], 16
    $region29: #{tpu_custom_call.1} parent=1 // pred_fallthru
      _
    %216 = vsyncpa [#allocation4], 1

</llo_original>
